<compile_context>
chip_gen: v7x
topology: tpu7x:2x2x1
jax: 0.10.0
libtpu: 0.0.40
codegen_flags: <defaults>
</compile_context>

<pallas_src>
import functools

import jax
import jax.numpy as jnp
from jax.experimental import pallas as pl
from jax.experimental.pallas import tpu as pltpu

BN_EPS = 1e-5


def _round_up(n, m):
    return ((n + m - 1) // m) * m


# ---------------------------------------------------------------------------
# Kernel: x -> bf16 -> @W1'+b1' -> relu -> @W2'+b2' -> relu -> @W34+b34
# (dropout layers are identity in eval mode; BNs are pre-folded into weights)
# ---------------------------------------------------------------------------
def face_mlp_kernel(x_ref, w1_ref, b1_ref, w2_ref, b2_ref, w34_ref, b34_ref, o_ref):
    # In-kernel cast of the f32 input tile to bf16 (free VPU work; avoids a
    # separate wrapper-side pad/cast pass over HBM).
    x = x_ref[...].astype(jnp.bfloat16)                                  # (TB, 48)

    # fc1 (+ bn1 folded) -> relu            [dropout1 = identity in eval]
    h = jnp.dot(x, w1_ref[...], preferred_element_type=jnp.float32)      # (TB, 128)
    h = jnp.maximum(h + b1_ref[...], 0.0).astype(jnp.bfloat16)

    # fc2 (+ bn2 folded) -> relu            [dropout2 = identity in eval]
    h = jnp.dot(h, w2_ref[...], preferred_element_type=jnp.float32)      # (TB, 64)
    h = jnp.maximum(h + b2_ref[...], 0.0).astype(jnp.bfloat16)

    # fc3 (+ bn3 folded) and fc4 collapsed into one affine layer; narrow store.
    out = jnp.dot(h, w34_ref[...], preferred_element_type=jnp.float32)   # (TB, 10)
    o_ref[...] = out + b34_ref[...]


# ---------------------------------------------------------------------------
# Offline parameter preparation: fold BN, collapse fc3/fc4, cast to bf16.
# No feature-dim padding — blocks use full array dims where < 128.
# ---------------------------------------------------------------------------
def prepare_params(p):
    def fold(w, b, g, be, m, v):
        s = g * jax.lax.rsqrt(v + BN_EPS)          # (1, H)
        return w * s, (b - m) * s + be             # (in, H), (1, H)

    w1f, b1f = fold(p["w1"], p["b1"], p["g1"], p["be1"], p["m1"], p["v1"])
    w2f, b2f = fold(p["w2"], p["b2"], p["g2"], p["be2"], p["m2"], p["v2"])
    w3f, b3f = fold(p["w3"], p["b3"], p["g3"], p["be3"], p["m3"], p["v3"])

    # fc3' (affine) followed by fc4 (affine) == one affine layer (exact in f32).
    w34 = w3f @ p["w4"]
    b34 = b3f @ p["w4"] + p["b4"]

    return dict(
        w1=w1f.astype(jnp.bfloat16), b1=b1f,       # biases stay f32
        w2=w2f.astype(jnp.bfloat16), b2=b2f,
        w34=w34.astype(jnp.bfloat16), b34=b34,
    )


# ---------------------------------------------------------------------------
# Forward wrapper: batch grid, weights VMEM-resident, narrow input/output.
# ---------------------------------------------------------------------------
@jax.jit
def face_mlp_forward(x, prep):
    B, F = x.shape
    h1 = prep["w1"].shape[1]
    h2 = prep["w2"].shape[1]
    out_dim = prep["w34"].shape[1]

    # Batch tile: multiple of 16 (bf16 sublane tile), capped at 2048 rows so
    # per-step DMA+compute dwarfs the ~0.35us grid-step overhead while keeping
    # batch-padding waste and VMEM (~1 MiB double-buffered) small on all gens.
    TB = min(_round_up(B, 16), 2048)
    Bp = _round_up(B, TB)
    xb = x if Bp == B else jnp.pad(x, ((0, Bp - B), (0, 0)))

    # Advisory cost hint for XLA scheduling around the short custom call.
    flops = 2 * Bp * (F * h1 + h1 * h2 + h2 * out_dim)
    bytes_accessed = (
        Bp * F * 4 + Bp * out_dim * 4                       # x read + out write
        + 2 * (F * h1 + h1 * h2 + h2 * out_dim)             # bf16 weights
        + 4 * (h1 + h2 + out_dim)                           # f32 biases
    )

    out = pl.pallas_call(
        face_mlp_kernel,
        out_shape=jax.ShapeDtypeStruct((Bp, out_dim), jnp.float32),
        grid_spec=pltpu.PrefetchScalarGridSpec(
            num_scalar_prefetch=0,
            grid=(Bp // TB,),
            in_specs=[
                pl.BlockSpec((TB, F), lambda i: (i, 0)),        # x tile (f32, narrow)
                pl.BlockSpec((F, h1), lambda i: (0, 0)),        # W1' (resident)
                pl.BlockSpec((1, h1), lambda i: (0, 0)),        # b1'
                pl.BlockSpec((h1, h2), lambda i: (0, 0)),       # W2' (resident)
                pl.BlockSpec((1, h2), lambda i: (0, 0)),        # b2'
                pl.BlockSpec((h2, out_dim), lambda i: (0, 0)),  # W34 (resident)
                pl.BlockSpec((1, out_dim), lambda i: (0, 0)),   # b34
            ],
            out_specs=pl.BlockSpec((TB, out_dim), lambda i: (i, 0)),  # narrow store
        ),
        compiler_params=pltpu.CompilerParams(
            # Batch axis is independent; on v7x, pltpu.CORE_PARALLEL here would
            # shard across both TensorCores (kept "parallel" for portability).
            dimension_semantics=("parallel",),
        ),
        cost_estimate=pl.CostEstimate(
            flops=flops, transcendentals=0, bytes_accessed=bytes_accessed
        ),
    )(xb, prep["w1"], prep["b1"], prep["w2"], prep["b2"], prep["w34"], prep["b34"])

    return out[:B] if Bp != B else out


# ---------------------------------------------------------------------------
# Synthetic parameters matching the PyTorch module, and a pure-JAX reference.
# ---------------------------------------------------------------------------
def init_params(key, input_size, hidden1, hidden2, output_size):
    ks = jax.random.split(key, 12)
    dt = jnp.float32

    def lin(kw, kb, fan_in, fan_out):
        bound = 1.0 / jnp.sqrt(fan_in)
        w = jax.random.uniform(kw, (fan_in, fan_out), dt, -bound, bound)  # (in, out)
        b = jax.random.uniform(kb, (1, fan_out), dt, -bound, bound)
        return w, b

    def bn_stats(kg, h):
        k1, k2, k3 = jax.random.split(kg, 3)
        gamma = 1.0 + 0.1 * jax.random.normal(k1, (1, h), dt)
        beta = 0.1 * jax.random.normal(k2, (1, h), dt)
        mean = 0.1 * jax.random.normal(k3, (1, h), dt)
        var = jnp.ones((1, h), dt)
        return gamma, beta, mean, var

    w1, b1 = lin(ks[0], ks[1], input_size, hidden1)
    w2, b2 = lin(ks[2], ks[3], hidden1, hidden2)
    w3, b3 = lin(ks[4], ks[5], hidden2, hidden2)
    w4, b4 = lin(ks[6], ks[7], hidden2, output_size)
    g1, be1, m1, v1 = bn_stats(ks[8], hidden1)
    g2, be2, m2, v2 = bn_stats(ks[9], hidden2)
    g3, be3, m3, v3 = bn_stats(ks[10], hidden2)

    return dict(
        w1=w1, b1=b1, g1=g1, be1=be1, m1=m1, v1=v1,
        w2=w2, b2=b2, g2=g2, be2=be2, m2=m2, v2=v2,
        w3=w3, b3=b3, g3=g3, be3=be3, m3=m3, v3=v3,
        w4=w4, b4=b4,
    )


def reference_forward(x, p):
    def bn(h, g, be, m, v):
        return (h - m) * jax.lax.rsqrt(v + BN_EPS) * g + be

    h = jnp.maximum(bn(x @ p["w1"] + p["b1"], p["g1"], p["be1"], p["m1"], p["v1"]), 0.0)
    h = jnp.maximum(bn(h @ p["w2"] + p["b2"], p["g2"], p["be2"], p["m2"], p["v2"]), 0.0)
    h = bn(h @ p["w3"] + p["b3"], p["g3"], p["be3"], p["m3"], p["v3"])
    return h @ p["w4"] + p["b4"]


if __name__ == "__main__":
    # FaceMLP(input_size=48, hidden1=128, hidden2=64, output_size=10), batch 16.
    B, INPUT, H1, H2, OUT = 16, 48, 128, 64, 10

    key = jax.random.PRNGKey(0)
    kx, kp = jax.random.split(key)
    x = jax.random.normal(kx, (B, INPUT), jnp.float32)
    params = init_params(kp, INPUT, H1, H2, OUT)
    prep = prepare_params(params)

    out = face_mlp_forward(x, prep)
    jax.block_until_ready(out)

    ref = reference_forward(x, params)
    assert out.shape == (B, OUT)
    # bf16 weights/activations -> relaxed tolerance vs. the f32 reference.
    assert jnp.allclose(out, ref, atol=5e-2, rtol=5e-2), float(jnp.max(jnp.abs(out - ref)))

    print("KERNEL_OK")
</pallas_src>

<mosaic_0001>
module attributes {stable_mosaic.version = 11 : i64} {
  func.func @face_mlp_kernel(%arg0: i32, %arg1: memref<16x48xf32, #tpu.memory_space<vmem>>, %arg2: memref<48x128xbf16, #tpu.memory_space<vmem>>, %arg3: memref<1x128xf32, #tpu.memory_space<vmem>>, %arg4: memref<128x64xbf16, #tpu.memory_space<vmem>>, %arg5: memref<1x64xf32, #tpu.memory_space<vmem>>, %arg6: memref<64x10xbf16, #tpu.memory_space<vmem>>, %arg7: memref<1x10xf32, #tpu.memory_space<vmem>>, %arg8: memref<16x10xf32, #tpu.memory_space<vmem>>) attributes {dimension_semantics = [#tpu.dimension_semantics<parallel>], iteration_bounds = array<i64: 1>, scalar_prefetch = 0 : i64, scratch_operands = 0 : i64, tpu.core_type = #tpu.core_type<tc>, window_params = [{transform_indices = @transform_0, window_bounds = array<i64: 16, 48>}, {pipeline_mode = #tpu.pipeline_mode<synchronous>, transform_indices = @transform_1, window_bounds = array<i64: 48, 128>}, {pipeline_mode = #tpu.pipeline_mode<synchronous>, transform_indices = @transform_2, window_bounds = array<i64: 1, 128>}, {pipeline_mode = #tpu.pipeline_mode<synchronous>, transform_indices = @transform_3, window_bounds = array<i64: 128, 64>}, {pipeline_mode = #tpu.pipeline_mode<synchronous>, transform_indices = @transform_4, window_bounds = array<i64: 1, 64>}, {pipeline_mode = #tpu.pipeline_mode<synchronous>, transform_indices = @transform_5, window_bounds = array<i64: 64, 10>}, {pipeline_mode = #tpu.pipeline_mode<synchronous>, transform_indices = @transform_6, window_bounds = array<i64: 1, 10>}, {transform_indices = @transform_7, window_bounds = array<i64: 16, 10>}]} {
    %c0 = arith.constant 0 : index
    %c0_0 = arith.constant 0 : index
    %0 = vector.load %arg1[%c0, %c0_0] : memref<16x48xf32, #tpu.memory_space<vmem>>, vector<16x48xf32>
    %1 = arith.truncf %0 : vector<16x48xf32> to vector<16x48xbf16>
    %c0_1 = arith.constant 0 : index
    %c0_2 = arith.constant 0 : index
    %2 = vector.load %arg2[%c0_1, %c0_2] : memref<48x128xbf16, #tpu.memory_space<vmem>>, vector<48x128xbf16>
    %cst = arith.constant dense<0.000000e+00> : vector<16x128xf32>
    %3 = tpu.matmul %1, %2, %cst {dimension_numbers = #tpu.dot_dimension_numbers<[1], [0], [0], [1], [0, 0, 1, 1], [], []>} : vector<16x48xbf16>, vector<48x128xbf16>, vector<16x128xf32> -> vector<16x128xf32>
    %c0_3 = arith.constant 0 : index
    %c0_4 = arith.constant 0 : index
    %4 = vector.load %arg3[%c0_3, %c0_4] : memref<1x128xf32, #tpu.memory_space<vmem>>, vector<1x128xf32>
    %5 = vector.broadcast %4 : vector<1x128xf32> to vector<16x128xf32>
    %6 = arith.addf %3, %5 : vector<16x128xf32>
    %cst_5 = arith.constant 0.000000e+00 : f32
    %7 = vector.broadcast %cst_5 : f32 to vector<16x128xf32>
    %8 = arith.maximumf %6, %7 : vector<16x128xf32>
    %9 = arith.truncf %8 : vector<16x128xf32> to vector<16x128xbf16>
    %c0_6 = arith.constant 0 : index
    %c0_7 = arith.constant 0 : index
    %10 = vector.load %arg4[%c0_6, %c0_7] : memref<128x64xbf16, #tpu.memory_space<vmem>>, vector<128x64xbf16>
    %cst_8 = arith.constant dense<0.000000e+00> : vector<16x64xf32>
    %11 = tpu.matmul %9, %10, %cst_8 {dimension_numbers = #tpu.dot_dimension_numbers<[1], [0], [0], [1], [0, 0, 1, 1], [], []>} : vector<16x128xbf16>, vector<128x64xbf16>, vector<16x64xf32> -> vector<16x64xf32>
    %c0_9 = arith.constant 0 : index
    %c0_10 = arith.constant 0 : index
    %12 = vector.load %arg5[%c0_9, %c0_10] : memref<1x64xf32, #tpu.memory_space<vmem>>, vector<1x64xf32>
    %13 = vector.broadcast %12 : vector<1x64xf32> to vector<16x64xf32>
    %14 = arith.addf %11, %13 : vector<16x64xf32>
    %cst_11 = arith.constant 0.000000e+00 : f32
    %15 = vector.broadcast %cst_11 : f32 to vector<16x64xf32>
    %16 = arith.maximumf %14, %15 : vector<16x64xf32>
    %17 = arith.truncf %16 : vector<16x64xf32> to vector<16x64xbf16>
    %c0_12 = arith.constant 0 : index
    %c0_13 = arith.constant 0 : index
    %18 = vector.load %arg6[%c0_12, %c0_13] : memref<64x10xbf16, #tpu.memory_space<vmem>>, vector<64x10xbf16>
    %cst_14 = arith.constant dense<0.000000e+00> : vector<16x10xf32>
    %19 = tpu.matmul %17, %18, %cst_14 {dimension_numbers = #tpu.dot_dimension_numbers<[1], [0], [0], [1], [0, 0, 1, 1], [], []>} : vector<16x64xbf16>, vector<64x10xbf16>, vector<16x10xf32> -> vector<16x10xf32>
    %c0_15 = arith.constant 0 : index
    %c0_16 = arith.constant 0 : index
    %20 = vector.load %arg7[%c0_15, %c0_16] : memref<1x10xf32, #tpu.memory_space<vmem>>, vector<1x10xf32>
    %21 = vector.broadcast %20 : vector<1x10xf32> to vector<16x10xf32>
    %22 = arith.addf %19, %21 : vector<16x10xf32>
    %c0_17 = arith.constant 0 : index
    %c0_18 = arith.constant 0 : index
    %23 = vector.load %arg8[%c0_17, %c0_18] : memref<16x10xf32, #tpu.memory_space<vmem>>, vector<16x10xf32>
    tpu.vector_store %arg8[%c0_17, %c0_18], %22 {strides = array<i32>} : memref<16x10xf32, #tpu.memory_space<vmem>>, vector<16x10xf32>,
    return
  }
  func.func @transform_0(%arg0: i32) -> (i32, i32) {
    %c0_i32 = arith.constant 0 : i32
    %c0_i32_0 = arith.constant 0 : i32
    return %arg0, %c0_i32 : i32, i32
  }
  func.func @transform_1(%arg0: i32) -> (i32, i32) {
    %c0_i32 = arith.constant 0 : i32
    %c0_i32_0 = arith.constant 0 : i32
    %c0_i32_1 = arith.constant 0 : i32
    return %c0_i32, %c0_i32_0 : i32, i32
  }
  func.func @transform_2(%arg0: i32) -> (i32, i32) {
    %c0_i32 = arith.constant 0 : i32
    %c0_i32_0 = arith.constant 0 : i32
    %c0_i32_1 = arith.constant 0 : i32
    return %c0_i32, %c0_i32_0 : i32, i32
  }
  func.func @transform_3(%arg0: i32) -> (i32, i32) {
    %c0_i32 = arith.constant 0 : i32
    %c0_i32_0 = arith.constant 0 : i32
    %c0_i32_1 = arith.constant 0 : i32
    return %c0_i32, %c0_i32_0 : i32, i32
  }
  func.func @transform_4(%arg0: i32) -> (i32, i32) {
    %c0_i32 = arith.constant 0 : i32
    %c0_i32_0 = arith.constant 0 : i32
    %c0_i32_1 = arith.constant 0 : i32
    return %c0_i32, %c0_i32_0 : i32, i32
  }
  func.func @transform_5(%arg0: i32) -> (i32, i32) {
    %c0_i32 = arith.constant 0 : i32
    %c0_i32_0 = arith.constant 0 : i32
    %c0_i32_1 = arith.constant 0 : i32
    return %c0_i32, %c0_i32_0 : i32, i32
  }
  func.func @transform_6(%arg0: i32) -> (i32, i32) {
    %c0_i32 = arith.constant 0 : i32
    %c0_i32_0 = arith.constant 0 : i32
    %c0_i32_1 = arith.constant 0 : i32
    return %c0_i32, %c0_i32_0 : i32, i32
  }
  func.func @transform_7(%arg0: i32) -> (i32, i32) {
    %c0_i32 = arith.constant 0 : i32
    %c0_i32_0 = arith.constant 0 : i32
    return %arg0, %c0_i32 : i32, i32
  }
}

</mosaic_0001>

<llo_original>
// kernel: face_mlp_forward.1
$region0: #{face_mlp_forward.1}
  #allocation0 [shape = 'u32[]', space=smem, size = 0x4, offset = 0x4, fixed_abs, tag = 'smem constant byte address 0x4 - core index']
  #allocation1 [shape = 'u32[144,128]{1,0:T(1,128)}', space=vmem, size = 0x12000, scoped, tag = 'internal scratch']
  %s0 = inlined_call_operand.vmem [shape: f32[16,48], index: 0, kind: input, shape index: {}]
  %s1 = inlined_call_operand.vmem [shape: bf16[48,128], index: 1, kind: input, shape index: {}]
  %s2 = inlined_call_operand.vmem [shape: f32[1,128], index: 2, kind: input, shape index: {}]
  %s3 = inlined_call_operand.vmem [shape: bf16[128,64], index: 3, kind: input, shape index: {}]
  %s4 = inlined_call_operand.vmem [shape: f32[1,64], index: 4, kind: input, shape index: {}]
  %s5 = inlined_call_operand.vmem [shape: bf16[64,10], index: 5, kind: input, shape index: {}]
  %s6 = inlined_call_operand.vmem [shape: f32[1,10], index: 6, kind: input, shape index: {}]
  %s7 = inlined_call_operand.hbm [shape: f32[16,10], index: 7, kind: output, shape index: {}]
  %s8 = sld [smem:[#allocation0]]
  $region38: #{face_mlp_forward.1} parent=0
    _
  %s10 = ssub.s32 1, %s8
  %s11 = scalar_select 0, %s10, %s8
  $region1: #{face_mlp_forward.1} parent=0
    #allocation2 [shape = 'u8[8192]{0}', space=vmem, size = 0x2000, scoped, tag = 'output window, operand 0, single buffered']
    #allocation3 [shape = 's32[1]{0}', space=sflag, size = 0x4, scoped, tag = 'scoped memory for face_mlp_forward.1']
    %12 = vsyncpa [#allocation3], 0
    // Predicated region
    $region2: #{face_mlp_forward.1} parent=1 // pred_check
      _
    $region3: #{face_mlp_forward.1} parent=1 // pred_check_branch
      %14 = sbr.rel (0) target = $region5
    $region4: #{face_mlp_forward.1} parent=1 // pred_region
      _
    $region5: #{face_mlp_forward.1} parent=1 // pred_fallthru
      _
    // Predicated region
    $region6: #{face_mlp_forward.1} parent=1 // pred_check
      _
    $region7: #{face_mlp_forward.1} parent=1 // pred_check_branch
      %16 = sbr.rel (0) target = $region9
    $region8: #{face_mlp_forward.1} parent=1 // pred_region
      _
    $region9: #{face_mlp_forward.1} parent=1 // pred_fallthru
      _
    // Predicated region
    $region10: #{face_mlp_forward.1} parent=1 // pred_check
      _
    $region11: #{face_mlp_forward.1} parent=1 // pred_check_branch
      %18 = sbr.rel (0) target = $region13
    $region12: #{face_mlp_forward.1} parent=1 // pred_region
      _
    $region13: #{face_mlp_forward.1} parent=1 // pred_fallthru
      _
    // Predicated region
    $region14: #{face_mlp_forward.1} parent=1 // pred_check
      _
    $region15: #{face_mlp_forward.1} parent=1 // pred_check_branch
      %20 = sbr.rel (0) target = $region17
    $region16: #{face_mlp_forward.1} parent=1 // pred_region
      _
    $region17: #{face_mlp_forward.1} parent=1 // pred_fallthru
      _
    // Predicated region
    $region18: #{face_mlp_forward.1} parent=1 // pred_check
      _
    $region19: #{face_mlp_forward.1} parent=1 // pred_check_branch
      %22 = sbr.rel (0) target = $region21
    $region20: #{face_mlp_forward.1} parent=1 // pred_region
      _
    $region21: #{face_mlp_forward.1} parent=1 // pred_fallthru
      _
    // Predicated region
    $region22: #{face_mlp_forward.1} parent=1 // pred_check
      _
    $region23: #{face_mlp_forward.1} parent=1 // pred_check_branch
      %24 = sbr.rel (0) target = $region25
    $region24: #{face_mlp_forward.1} parent=1 // pred_region
      _
    $region25: #{face_mlp_forward.1} parent=1 // pred_fallthru
      _
    // Predicated region
    $region26: #{face_mlp_forward.1} parent=1 // pred_check
      _
    $region27: #{face_mlp_forward.1} parent=1 // pred_check_branch
      %26 = sbr.rel (0) target = $region29
    $region28: #{face_mlp_forward.1} parent=1 // pred_region
      _
    $region29: #{face_mlp_forward.1} parent=1 // pred_fallthru
      _
    %v28 = vld [vmem:[%s0] sm:$0xff]
    %v29 = vld [vmem:[%s0 + $0x8] sm:$0xff]
    %v30 = vpack.c.bf16 %v29, %v28
    %v31 = vld [vmem:[%s1] sm:$0xf]
    %v32 = vld [vmem:[%s1 + $0x4] sm:$0xf]
    %v33 = vld [vmem:[%s1 + $0x8] sm:$0xf]
    %v34 = vld [vmem:[%s1 + $0xc] sm:$0xf]
    %v35 = vld [vmem:[%s1 + $0x10] sm:$0xf]
    %v36 = vld [vmem:[%s1 + $0x14] sm:$0xf]
    %v37 = vld [vmem:[%s2] sm:$0x1]
    %v39 = vlaneseq
    %v40 = vshrl.u32 %v39, 7
    %v41 = vsub.s32 0, %v40
    %v42 = vrot.slane %v37, %v41
    %v50 = vunpack.c.l.b16 %v31
    %v51 = vunpack.c.l.b16 %v32
    %v52 = vunpack.c.l.b16 %v33
    %v53 = vunpack.c.l.b16 %v34
    %v54 = vunpack.c.l.b16 %v35
    %v55 = vunpack.c.l.b16 %v36
    %v56 = vpack.c.b16 %v51, %v50
    %v57 = vpack.c.b16 %v53, %v52
    %v58 = vpack.c.b16 %v55, %v54
    %vm62 = vcmask 392192
    %v64 = vsel %vm62, %v30, 0
    %66 = vmatprep.subr.bf16.mxu0 0
    %67 = vmatpush1.bf16.msra.mxu0 %v56
    %68 = vmatprep.subr.bf16.mxu0 0
    %69 = vmatpush1.bf16.msra.mxu0 %v57
    %70 = vmatprep.subr.bf16.mxu0 0
    %71 = vmatpush1.bf16.msra.mxu0 %v58
    %72 = vmatprep.subr.bf16.mxu0 0
    %73 = vmatpush1.bf16.msra.mxu0 0
    %74 = vmatprep.subr.bf16.mxu0 0
    %75 = vmatpush1.bf16.msra.mxu0 0
    %76 = vmatprep.subr.bf16.mxu0 0
    %77 = vmatpush1.bf16.msra.mxu0 0
    %78 = vmatprep.subr.bf16.mxu0 0
    %79 = vmatpush1.bf16.msra.mxu0 0
    %80 = vmatprep.subr.bf16.mxu0 0
    %81 = vmatpush1.bf16.msra.mxu0 0
    %82 = vmatprep.subr.bf16.mxu0 0
    %83 = vmatpush1.bf16.msra.mxu0 0
    %84 = vmatprep.subr.bf16.mxu0 0
    %85 = vmatpush1.bf16.msra.mxu0 0
    %86 = vmatprep.subr.bf16.mxu0 0
    %87 = vmatpush1.bf16.msra.mxu0 0
    %88 = vmatprep.subr.bf16.mxu0 0
    %89 = vmatpush1.bf16.msra.mxu0 0
    %90 = vmatprep.subr.bf16.mxu0 0
    %91 = vmatpush1.bf16.msra.mxu0 0
    %92 = vmatprep.subr.bf16.mxu0 0
    %93 = vmatpush1.bf16.msra.mxu0 0
    %94 = vmatprep.subr.bf16.mxu0 0
    %95 = vmatpush1.bf16.msra.mxu0 0
    %96 = vmatprep.subr.bf16.mxu0 0
    %97 = vmatpush1.bf16.msra.mxu0 0
    %98 = vmatprep.mubr.bf16.mxu0 0
    %99 = vmatmul.mubr.bf16.gmra.mrb[0].mxu0 %v64
    %v100 = vpop.f32.mrb[0].mxu0
    %v101 = vadd.f32 %v42, %v100
    %v102 = vpop.f32.mrb[0].mxu0
    %v103 = vpop.f32.mrb[0].mxu0
    %v104 = vadd.f32 %v42, %v103
    %v105 = vpop.f32.mrb[0].mxu0
    %106 = vdwg.mxu0
    %v107 = vmax.f32 %v101, 0.0
    %v108 = vmax.f32 %v104, 0.0
    %v109 = vpack.c.bf16 %v108, %v107
    %v110 = vld [vmem:[%s3] sm:$0xf]
    %v111 = vld [vmem:[%s3 + $0x4] sm:$0xf]
    %v112 = vld [vmem:[%s3 + $0x8] sm:$0xf]
    %v113 = vld [vmem:[%s3 + $0xc] sm:$0xf]
    %v114 = vld [vmem:[%s3 + $0x10] sm:$0xf]
    %v115 = vld [vmem:[%s3 + $0x14] sm:$0xf]
    %v116 = vld [vmem:[%s3 + $0x18] sm:$0xf]
    %v117 = vld [vmem:[%s3 + $0x1c] sm:$0xf]
    %v118 = vld [vmem:[%s3 + $0x20] sm:$0xf]
    %v119 = vld [vmem:[%s3 + $0x24] sm:$0xf]
    %v120 = vld [vmem:[%s3 + $0x28] sm:$0xf]
    %v121 = vld [vmem:[%s3 + $0x2c] sm:$0xf]
    %v122 = vld [vmem:[%s3 + $0x30] sm:$0xf]
    %v123 = vld [vmem:[%s3 + $0x34] sm:$0xf]
    %v124 = vld [vmem:[%s3 + $0x38] sm:$0xf]
    %v125 = vld [vmem:[%s3 + $0x3c] sm:$0xf]
    %v126 = vld [vmem:[%s4] sm:$0x1]
    %v128 = vlaneseq
    %v129 = vshrl.u32 %v128, 7
    %v130 = vsub.s32 0, %v129
    %v131 = vrot.slane %v126, %v130
    %v149 = vunpack.c.l.b16 %v110
    %v150 = vunpack.c.l.b16 %v111
    %v151 = vunpack.c.l.b16 %v112
    %v152 = vunpack.c.l.b16 %v113
    %v153 = vunpack.c.l.b16 %v114
    %v154 = vunpack.c.l.b16 %v115
    %v155 = vunpack.c.l.b16 %v116
    %v156 = vunpack.c.l.b16 %v117
    %v157 = vunpack.c.l.b16 %v118
    %v158 = vunpack.c.l.b16 %v119
    %v159 = vunpack.c.l.b16 %v120
    %v160 = vunpack.c.l.b16 %v121
    %v161 = vunpack.c.l.b16 %v122
    %v162 = vunpack.c.l.b16 %v123
    %v163 = vunpack.c.l.b16 %v124
    %v164 = vunpack.c.l.b16 %v125
    %v165 = vpack.c.b16 %v150, %v149
    %v166 = vpack.c.b16 %v152, %v151
    %v167 = vpack.c.b16 %v154, %v153
    %v168 = vpack.c.b16 %v156, %v155
    %v169 = vpack.c.b16 %v158, %v157
    %v170 = vpack.c.b16 %v160, %v159
    %v171 = vpack.c.b16 %v162, %v161
    %v172 = vpack.c.b16 %v164, %v163
    %181 = vmatprep.subr.bf16.mxu0 0
    %182 = vmatpush1.bf16.msra.mxu0 %v165
    %183 = vmatprep.subr.bf16.mxu0 0
    %184 = vmatpush1.bf16.msra.mxu0 %v166
    %185 = vmatprep.subr.bf16.mxu0 0
    %186 = vmatpush1.bf16.msra.mxu0 %v167
    %187 = vmatprep.subr.bf16.mxu0 0
    %188 = vmatpush1.bf16.msra.mxu0 %v168
    %189 = vmatprep.subr.bf16.mxu0 0
    %190 = vmatpush1.bf16.msra.mxu0 %v169
    %191 = vmatprep.subr.bf16.mxu0 0
    %192 = vmatpush1.bf16.msra.mxu0 %v170
    %193 = vmatprep.subr.bf16.mxu0 0
    %194 = vmatpush1.bf16.msra.mxu0 %v171
    %195 = vmatprep.subr.bf16.mxu0 0
    %196 = vmatpush1.bf16.msra.mxu0 %v172
    %197 = vmatprep.subr.bf16.mxu0 0
    %198 = vmatpush1.bf16.msra.mxu0 0
    %199 = vmatprep.subr.bf16.mxu0 0
    %200 = vmatpush1.bf16.msra.mxu0 0
    %201 = vmatprep.subr.bf16.mxu0 0
    %202 = vmatpush1.bf16.msra.mxu0 0
    %203 = vmatprep.subr.bf16.mxu0 0
    %204 = vmatpush1.bf16.msra.mxu0 0
    %205 = vmatprep.subr.bf16.mxu0 0
    %206 = vmatpush1.bf16.msra.mxu0 0
    %207 = vmatprep.subr.bf16.mxu0 0
    %208 = vmatpush1.bf16.msra.mxu0 0
    %209 = vmatprep.subr.bf16.mxu0 0
    %210 = vmatpush1.bf16.msra.mxu0 0
    %211 = vmatprep.subr.bf16.mxu0 0
    %212 = vmatpush1.bf16.msra.mxu0 0
    %213 = vmatprep.mubr.bf16.mxu0 0
    %214 = vmatmul.mubr.bf16.gmra.mrb[0].mxu0 %v109
    %v215 = vpop.f32.mrb[0].mxu0
    %v216 = vadd.f32 %v131, %v215
    %v217 = vpop.f32.mrb[0].mxu0
    %v218 = vpop.f32.mrb[0].mxu0
    %v219 = vadd.f32 %v131, %v218
    %v220 = vpop.f32.mrb[0].mxu0
    %221 = vdwg.mxu0
    %v222 = vmax.f32 %v216, 0.0
    %v223 = vmax.f32 %v219, 0.0
    %v224 = vpack.c.bf16 %v223, %v222
    %v225 = vld [vmem:[%s5] sm:$0xf]
    %v226 = vld [vmem:[%s5 + $0x4] sm:$0xf]
    %v227 = vld [vmem:[%s5 + $0x8] sm:$0xf]
    %v228 = vld [vmem:[%s5 + $0xc] sm:$0xf]
    %v229 = vld [vmem:[%s5 + $0x10] sm:$0xf]
    %v230 = vld [vmem:[%s5 + $0x14] sm:$0xf]
    %v231 = vld [vmem:[%s5 + $0x18] sm:$0xf]
    %v232 = vld [vmem:[%s5 + $0x1c] sm:$0xf]
    %v233 = vld [vmem:[%s6] sm:$0x1]
    %v235 = vlaneseq
    %v236 = vshrl.u32 %v235, 7
    %v237 = vsub.s32 0, %v236
    %v238 = vrot.slane %v233, %v237
    %v248 = vunpack.c.l.b16 %v225
    %v249 = vunpack.c.l.b16 %v226
    %v250 = vunpack.c.l.b16 %v227
    %v251 = vunpack.c.l.b16 %v228
    %v252 = vunpack.c.l.b16 %v229
    %v253 = vunpack.c.l.b16 %v230
    %v254 = vunpack.c.l.b16 %v231
    %v255 = vunpack.c.l.b16 %v232
    %v256 = vpack.c.b16 %v249, %v248
    %v257 = vpack.c.b16 %v251, %v250
    %v258 = vpack.c.b16 %v253, %v252
    %v259 = vpack.c.b16 %v255, %v254
    %vm264 = vcmask 523264
    %v266 = vsel %vm264, %v224, 0
    %268 = vmatprep.subr.bf16.mxu0 0
    %269 = vmatpush1.bf16.msra.mxu0 %v256
    %270 = vmatprep.subr.bf16.mxu0 0
    %271 = vmatpush1.bf16.msra.mxu0 %v257
    %272 = vmatprep.subr.bf16.mxu0 0
    %273 = vmatpush1.bf16.msra.mxu0 %v258
    %274 = vmatprep.subr.bf16.mxu0 0
    %275 = vmatpush1.bf16.msra.mxu0 %v259
    %276 = vmatprep.subr.bf16.mxu0 0
    %277 = vmatpush1.bf16.msra.mxu0 0
    %278 = vmatprep.subr.bf16.mxu0 0
    %279 = vmatpush1.bf16.msra.mxu0 0
    %280 = vmatprep.subr.bf16.mxu0 0
    %281 = vmatpush1.bf16.msra.mxu0 0
    %282 = vmatprep.subr.bf16.mxu0 0
    %283 = vmatpush1.bf16.msra.mxu0 0
    %284 = vmatprep.subr.bf16.mxu0 0
    %285 = vmatpush1.bf16.msra.mxu0 0
    %286 = vmatprep.subr.bf16.mxu0 0
    %287 = vmatpush1.bf16.msra.mxu0 0
    %288 = vmatprep.subr.bf16.mxu0 0
    %289 = vmatpush1.bf16.msra.mxu0 0
    %290 = vmatprep.subr.bf16.mxu0 0
    %291 = vmatpush1.bf16.msra.mxu0 0
    %292 = vmatprep.subr.bf16.mxu0 0
    %293 = vmatpush1.bf16.msra.mxu0 0
    %294 = vmatprep.subr.bf16.mxu0 0
    %295 = vmatpush1.bf16.msra.mxu0 0
    %296 = vmatprep.subr.bf16.mxu0 0
    %297 = vmatpush1.bf16.msra.mxu0 0
    %298 = vmatprep.subr.bf16.mxu0 0
    %299 = vmatpush1.bf16.msra.mxu0 0
    %300 = vmatprep.mubr.bf16.mxu0 0
    %301 = vmatmul.mubr.bf16.gmra.mrb[0].mxu0 %v266
    %v302 = vpop.f32.mrb[0].mxu0
    %v303 = vadd.f32 %v238, %v302
    %v304 = vpop.f32.mrb[0].mxu0
    %v305 = vpop.f32.mrb[0].mxu0
    %v306 = vadd.f32 %v238, %v305
    %v307 = vpop.f32.mrb[0].mxu0
    %308 = vdwg.mxu0
    %vm309 = vcmask 80896
    %310 = vst.msk [vmem:[#allocation2] sm:$0xff] %vm309, %v303
    %311 = vst.msk [vmem:[#allocation2 + $0x8] sm:$0xff] %vm309, %v306
    // Predicated region
    $region30: #{face_mlp_forward.1} parent=1 // pred_check
      _
    $region31: #{face_mlp_forward.1} parent=1 // pred_check_branch
      %313 = sbr.rel (0) target = $region33
    $region32: #{face_mlp_forward.1} parent=1 // pred_region
      %s315 = ssub.s32 256, 256
      %316 = vsyncadd [#allocation3], %s315
      %s317 = sshll.u32 [#allocation2], 4
      %s318 = int_to_ptr.vmem [resolvable:$true] %s317
      %323 = dma.vmem_to_hbm [thread:$0]  %s318, 256, %s7, [#allocation3], 128, 128, 8
    $region33: #{face_mlp_forward.1} parent=1 // pred_fallthru
      _
    // Predicated region
    $region34: #{face_mlp_forward.1} parent=1 // pred_check
      _
    $region35: #{face_mlp_forward.1} parent=1 // pred_check_branch
      %325 = sbr.rel (0) target = $region37
    $region36: #{face_mlp_forward.1} parent=1 // pred_region
      %326 = dma.done [#allocation3], 256
    $region37: #{face_mlp_forward.1} parent=1 // pred_fallthru
      _
    %327 = vsyncpa [#allocation3], 1

</llo_original>
